<compile_context>
chip_gen: v6e
topology: v6e:2x2x1
jax: 0.10.0
libtpu: 0.0.40
codegen_flags: <defaults>
</compile_context>

<pallas_src>
import functools

import jax
import jax.numpy as jnp
from jax import lax
from jax.experimental import pallas as pl
from jax.experimental.pallas import tpu as pltpu

LANES = 128  # lane width of a vreg


def _loss_sums_kernel(tg_ref, pg_ref, tc_ref, pc_ref, m_ref, out_ref, *,
                      rsub, r_valid, mask_tail):
    # tg_ref / pg_ref : (5, rsub, 128)  geo channels (d1, d2, d3, d4, theta)
    # tc_ref / pc_ref / m_ref : (rsub, 128)
    # out_ref : (4, 128)  per-lane sums for this (batch, pixel-chunk) block
    #           rows: intersection, sum_true, sum_pred, geo
    f32 = jnp.float32
    tc = tc_ref[...].astype(f32)
    pc = pc_ref[...].astype(f32)
    m = m_ref[...].astype(f32)

    cm = tc * m                      # y_true_cls * training_mask (reused 3x)
    inter = cm * pc
    s_pred = pc * m

    d1_gt = tg_ref[0].astype(f32)
    d2_gt = tg_ref[1].astype(f32)
    d3_gt = tg_ref[2].astype(f32)
    d4_gt = tg_ref[3].astype(f32)
    th_gt = tg_ref[4].astype(f32)
    d1_pr = pg_ref[0].astype(f32)
    d2_pr = pg_ref[1].astype(f32)
    d3_pr = pg_ref[2].astype(f32)
    d4_pr = pg_ref[3].astype(f32)
    th_pr = pg_ref[4].astype(f32)

    area_gt = (d1_gt + d3_gt) * (d2_gt + d4_gt)
    area_pr = (d1_pr + d3_pr) * (d2_pr + d4_pr)
    w_union = jnp.minimum(d2_gt, d2_pr) + jnp.minimum(d4_gt, d4_pr)
    h_union = jnp.minimum(d1_gt, d1_pr) + jnp.minimum(d3_gt, d3_pr)
    area_intersect = w_union * h_union
    area_union = area_gt + area_pr - area_intersect
    # -log((ai+1)/(au+1)) == log(au+1) - log(ai+1)
    l_aabb = jnp.log(area_union + 1.0) - jnp.log(area_intersect + 1.0)
    l_theta = 1.0 - jnp.cos(th_pr - th_gt)
    geo = (l_aabb + 20.0 * l_theta) * cm

    if mask_tail:
        # Rows past r_valid only exist in Pallas' implicit partial-block
        # padding (undefined contents) -> zero them before reducing.
        row0 = pl.program_id(1) * rsub
        rows = row0 + lax.broadcasted_iota(jnp.int32, (rsub, LANES), 0)
        valid = rows < r_valid
        zero = jnp.zeros_like(cm)
        inter = jnp.where(valid, inter, zero)
        cm = jnp.where(valid, cm, zero)
        s_pred = jnp.where(valid, s_pred, zero)
        geo = jnp.where(valid, geo, zero)

    out_ref[...] = jnp.concatenate(
        [jnp.sum(inter, axis=0, keepdims=True),
         jnp.sum(cm, axis=0, keepdims=True),
         jnp.sum(s_pred, axis=0, keepdims=True),
         jnp.sum(geo, axis=0, keepdims=True)], axis=0)


def loss_func(y_true_cls, y_pred_cls, y_true_geo, y_pred_geo, training_mask,
              block_rows=512):
    n, _, h, w = y_true_cls.shape
    hw = h * w

    # Pixels map onto (rows, 128 lanes).  Only a <=127-element lane tail is
    # ever zero-padded; partial row-chunks are masked inside the kernel.
    lane_pad = (-hw) % LANES
    r_total = (hw + lane_pad) // LANES

    block_rows = max(8, (int(block_rows) // 8) * 8)  # keep (8,128) divisibility
    if r_total <= block_rows:
        rsub = r_total            # full dim -> no (8,128) divisibility needed
        chunks = 1
    else:
        rsub = block_rows
        chunks = pl.cdiv(r_total, rsub)
    mask_tail = (r_total % rsub) != 0

    def prep(x, c):
        # Keep native dtype; cast happens in-kernel (bandwidth win for 16-bit
        # inputs).  Bools are widened for safe Pallas ingestion.
        if x.dtype == jnp.bool_:
            x = x.astype(jnp.float32)
        x = x.reshape(n, c, hw)                     # contiguous reshape
        if lane_pad:
            # TODO(synk): hw not a multiple of 128 still costs one padded copy.
            x = jnp.pad(x, ((0, 0), (0, 0), (0, lane_pad)))
        x = x.reshape(n, c, r_total, LANES)
        if c == 1:
            x = x.reshape(n, r_total, LANES)
        return x

    tg = prep(y_true_geo, 5)
    pg = prep(y_pred_geo, 5)
    tc = prep(y_true_cls, 1)
    pc = prep(y_pred_cls, 1)
    m = prep(training_mask, 1)

    geo_spec = pl.BlockSpec((None, 5, rsub, LANES), lambda b, r: (b, 0, r, 0))
    one_spec = pl.BlockSpec((None, rsub, LANES), lambda b, r: (b, r, 0))
    out_spec = pl.BlockSpec((None, None, 4, LANES), lambda b, r: (b, r, 0, 0))

    kernel = functools.partial(_loss_sums_kernel, rsub=rsub,
                               r_valid=r_total, mask_tail=mask_tail)

    partial_sums = pl.pallas_call(
        kernel,
        out_shape=jax.ShapeDtypeStruct((n, chunks, 4, LANES), jnp.float32),
        grid_spec=pltpu.PrefetchScalarGridSpec(
            num_scalar_prefetch=0,
            grid=(n, chunks),
            in_specs=[geo_spec, geo_spec, one_spec, one_spec, one_spec],
            out_specs=out_spec,
        ),
        compiler_params=pltpu.CompilerParams(
            dimension_semantics=("parallel", "parallel"),
            vmem_limit_bytes=32 * 1024 * 1024),
    )(tg, pg, tc, pc, m)

    sums = jnp.sum(partial_sums, axis=(0, 1, 3))  # (4,)
    intersection, s_true, s_pred, s_geo = sums[0], sums[1], sums[2], sums[3]

    eps = 1e-05
    dice_loss = 1.0 - 2.0 * intersection / (s_true + s_pred + eps)
    classification_loss = 0.01 * dice_loss
    geo_mean = s_geo / (n * hw)  # mean over the ORIGINAL (unpadded) pixels
    return geo_mean + classification_loss


def _reference(y_true_cls, y_pred_cls, y_true_geo, y_pred_geo, training_mask):
    eps = 1e-05
    yt = y_true_cls.astype(jnp.float32)
    yp = y_pred_cls.astype(jnp.float32)
    tm = training_mask.astype(jnp.float32)
    intersection = jnp.sum(yt * yp * tm)
    union = jnp.sum(yt * tm) + jnp.sum(yp * tm) + eps
    cls_loss = (1.0 - 2.0 * intersection / union) * 0.01

    d1_gt, d2_gt, d3_gt, d4_gt, th_gt = jnp.split(
        y_true_geo.astype(jnp.float32), 5, axis=1)
    d1_pr, d2_pr, d3_pr, d4_pr, th_pr = jnp.split(
        y_pred_geo.astype(jnp.float32), 5, axis=1)
    area_gt = (d1_gt + d3_gt) * (d2_gt + d4_gt)
    area_pr = (d1_pr + d3_pr) * (d2_pr + d4_pr)
    w_union = jnp.minimum(d2_gt, d2_pr) + jnp.minimum(d4_gt, d4_pr)
    h_union = jnp.minimum(d1_gt, d1_pr) + jnp.minimum(d3_gt, d3_pr)
    area_intersect = w_union * h_union
    area_union = area_gt + area_pr - area_intersect
    l_aabb = -jnp.log((area_intersect + 1.0) / (area_union + 1.0))
    l_theta = 1.0 - jnp.cos(th_pr - th_gt)
    l_g = l_aabb + 20.0 * l_theta
    return jnp.mean(l_g * yt * tm) + cls_loss


def _make_inputs(key, n, h, w):
    k1, k2, k3, k4, k5 = jax.random.split(key, 5)
    y_true_cls = (jax.random.uniform(k1, (n, 1, h, w)) > 0.5).astype(jnp.float32)
    y_pred_cls = jax.random.uniform(k2, (n, 1, h, w), dtype=jnp.float32)
    y_true_geo = jax.random.uniform(k3, (n, 5, h, w), dtype=jnp.float32,
                                    minval=0.1, maxval=8.0)
    y_pred_geo = jax.random.uniform(k4, (n, 5, h, w), dtype=jnp.float32,
                                    minval=0.1, maxval=8.0)
    training_mask = (jax.random.uniform(k5, (n, 1, h, w)) > 0.3).astype(jnp.float32)
    return y_true_cls, y_pred_cls, y_true_geo, y_pred_geo, training_mask


if __name__ == "__main__":
    key = jax.random.PRNGKey(0)
    k_a, k_b = jax.random.split(key)

    # Case 1: small aligned map (hw % 128 == 0, single chunk).
    args = _make_inputs(k_a, 2, 16, 16)
    out = jax.block_until_ready(loss_func(*args))
    ref = _reference(*args)
    assert jnp.allclose(out, ref, rtol=1e-5, atol=1e-5), (out, ref)

    # Case 2: ragged map (hw % 128 != 0) with tiny block_rows so the
    # multi-chunk path and in-kernel tail masking are exercised.
    args2 = _make_inputs(k_b, 2, 40, 40)
    out2 = jax.block_until_ready(loss_func(*args2, block_rows=8))
    ref2 = _reference(*args2)
    assert jnp.allclose(out2, ref2, rtol=1e-5, atol=1e-5), (out2, ref2)

    print("KERNEL_OK")
</pallas_src>

<mosaic_0001>
module attributes {stable_mosaic.version = 11 : i64} {
  func.func @_loss_sums_kernel(%arg0: i32, %arg1: i32, %arg2: memref<1x5x2x128xf32, #tpu.memory_space<vmem>>, %arg3: memref<1x5x2x128xf32, #tpu.memory_space<vmem>>, %arg4: memref<1x2x128xf32, #tpu.memory_space<vmem>>, %arg5: memref<1x2x128xf32, #tpu.memory_space<vmem>>, %arg6: memref<1x2x128xf32, #tpu.memory_space<vmem>>, %arg7: memref<1x1x4x128xf32, #tpu.memory_space<vmem>>) attributes {dimension_semantics = [#tpu.dimension_semantics<parallel>, #tpu.dimension_semantics<parallel>], iteration_bounds = array<i64: 2, 1>, scalar_prefetch = 0 : i64, scratch_operands = 0 : i64, tpu.core_type = #tpu.core_type<tc>, window_params = [{transform_indices = @transform_0, window_bounds = array<i64: 1, 5, 2, 128>}, {transform_indices = @transform_1, window_bounds = array<i64: 1, 5, 2, 128>}, {transform_indices = @transform_2, window_bounds = array<i64: 1, 2, 128>}, {transform_indices = @transform_3, window_bounds = array<i64: 1, 2, 128>}, {transform_indices = @transform_4, window_bounds = array<i64: 1, 2, 128>}, {transform_indices = @transform_5, window_bounds = array<i64: 1, 1, 4, 128>}]} {
    %c0 = arith.constant 0 : index
    %c0_0 = arith.constant 0 : index
    %c0_1 = arith.constant 0 : index
    %0 = vector.load %arg4[%c0, %c0_0, %c0_1] : memref<1x2x128xf32, #tpu.memory_space<vmem>>, vector<1x2x128xf32>
    %1 = vector.shape_cast %0 : vector<1x2x128xf32> to vector<2x128xf32>
    %c0_2 = arith.constant 0 : index
    %c0_3 = arith.constant 0 : index
    %c0_4 = arith.constant 0 : index
    %2 = vector.load %arg5[%c0_2, %c0_3, %c0_4] : memref<1x2x128xf32, #tpu.memory_space<vmem>>, vector<1x2x128xf32>
    %3 = vector.shape_cast %2 : vector<1x2x128xf32> to vector<2x128xf32>
    %c0_5 = arith.constant 0 : index
    %c0_6 = arith.constant 0 : index
    %c0_7 = arith.constant 0 : index
    %4 = vector.load %arg6[%c0_5, %c0_6, %c0_7] : memref<1x2x128xf32, #tpu.memory_space<vmem>>, vector<1x2x128xf32>
    %5 = vector.shape_cast %4 : vector<1x2x128xf32> to vector<2x128xf32>
    %6 = arith.mulf %1, %5 : vector<2x128xf32>
    %7 = arith.mulf %6, %3 : vector<2x128xf32>
    %8 = arith.mulf %3, %5 : vector<2x128xf32>
    %c0_8 = arith.constant 0 : index
    %c0_9 = arith.constant 0 : index
    %c0_10 = arith.constant 0 : index
    %c0_11 = arith.constant 0 : index
    %9 = vector.load %arg2[%c0_8, %c0_9, %c0_10, %c0_11] : memref<1x5x2x128xf32, #tpu.memory_space<vmem>>, vector<1x1x2x128xf32>
    %10 = vector.shape_cast %9 : vector<1x1x2x128xf32> to vector<2x128xf32>
    %c0_12 = arith.constant 0 : index
    %c1 = arith.constant 1 : index
    %c0_13 = arith.constant 0 : index
    %c0_14 = arith.constant 0 : index
    %11 = vector.load %arg2[%c0_12, %c1, %c0_13, %c0_14] : memref<1x5x2x128xf32, #tpu.memory_space<vmem>>, vector<1x1x2x128xf32>
    %12 = vector.shape_cast %11 : vector<1x1x2x128xf32> to vector<2x128xf32>
    %c0_15 = arith.constant 0 : index
    %c2 = arith.constant 2 : index
    %c0_16 = arith.constant 0 : index
    %c0_17 = arith.constant 0 : index
    %13 = vector.load %arg2[%c0_15, %c2, %c0_16, %c0_17] : memref<1x5x2x128xf32, #tpu.memory_space<vmem>>, vector<1x1x2x128xf32>
    %14 = vector.shape_cast %13 : vector<1x1x2x128xf32> to vector<2x128xf32>
    %c0_18 = arith.constant 0 : index
    %c3 = arith.constant 3 : index
    %c0_19 = arith.constant 0 : index
    %c0_20 = arith.constant 0 : index
    %15 = vector.load %arg2[%c0_18, %c3, %c0_19, %c0_20] : memref<1x5x2x128xf32, #tpu.memory_space<vmem>>, vector<1x1x2x128xf32>
    %16 = vector.shape_cast %15 : vector<1x1x2x128xf32> to vector<2x128xf32>
    %c0_21 = arith.constant 0 : index
    %c4 = arith.constant 4 : index
    %c0_22 = arith.constant 0 : index
    %c0_23 = arith.constant 0 : index
    %17 = vector.load %arg2[%c0_21, %c4, %c0_22, %c0_23] : memref<1x5x2x128xf32, #tpu.memory_space<vmem>>, vector<1x1x2x128xf32>
    %18 = vector.shape_cast %17 : vector<1x1x2x128xf32> to vector<2x128xf32>
    %c0_24 = arith.constant 0 : index
    %c0_25 = arith.constant 0 : index
    %c0_26 = arith.constant 0 : index
    %c0_27 = arith.constant 0 : index
    %19 = vector.load %arg3[%c0_24, %c0_25, %c0_26, %c0_27] : memref<1x5x2x128xf32, #tpu.memory_space<vmem>>, vector<1x1x2x128xf32>
    %20 = vector.shape_cast %19 : vector<1x1x2x128xf32> to vector<2x128xf32>
    %c0_28 = arith.constant 0 : index
    %c1_29 = arith.constant 1 : index
    %c0_30 = arith.constant 0 : index
    %c0_31 = arith.constant 0 : index
    %21 = vector.load %arg3[%c0_28, %c1_29, %c0_30, %c0_31] : memref<1x5x2x128xf32, #tpu.memory_space<vmem>>, vector<1x1x2x128xf32>
    %22 = vector.shape_cast %21 : vector<1x1x2x128xf32> to vector<2x128xf32>
    %c0_32 = arith.constant 0 : index
    %c2_33 = arith.constant 2 : index
    %c0_34 = arith.constant 0 : index
    %c0_35 = arith.constant 0 : index
    %23 = vector.load %arg3[%c0_32, %c2_33, %c0_34, %c0_35] : memref<1x5x2x128xf32, #tpu.memory_space<vmem>>, vector<1x1x2x128xf32>
    %24 = vector.shape_cast %23 : vector<1x1x2x128xf32> to vector<2x128xf32>
    %c0_36 = arith.constant 0 : index
    %c3_37 = arith.constant 3 : index
    %c0_38 = arith.constant 0 : index
    %c0_39 = arith.constant 0 : index
    %25 = vector.load %arg3[%c0_36, %c3_37, %c0_38, %c0_39] : memref<1x5x2x128xf32, #tpu.memory_space<vmem>>, vector<1x1x2x128xf32>
    %26 = vector.shape_cast %25 : vector<1x1x2x128xf32> to vector<2x128xf32>
    %c0_40 = arith.constant 0 : index
    %c4_41 = arith.constant 4 : index
    %c0_42 = arith.constant 0 : index
    %c0_43 = arith.constant 0 : index
    %27 = vector.load %arg3[%c0_40, %c4_41, %c0_42, %c0_43] : memref<1x5x2x128xf32, #tpu.memory_space<vmem>>, vector<1x1x2x128xf32>
    %28 = vector.shape_cast %27 : vector<1x1x2x128xf32> to vector<2x128xf32>
    %29 = arith.addf %10, %14 : vector<2x128xf32>
    %30 = arith.addf %12, %16 : vector<2x128xf32>
    %31 = arith.mulf %29, %30 : vector<2x128xf32>
    %32 = arith.addf %20, %24 : vector<2x128xf32>
    %33 = arith.addf %22, %26 : vector<2x128xf32>
    %34 = arith.mulf %32, %33 : vector<2x128xf32>
    %35 = arith.minimumf %12, %22 : vector<2x128xf32>
    %36 = arith.minimumf %16, %26 : vector<2x128xf32>
    %37 = arith.addf %35, %36 : vector<2x128xf32>
    %38 = arith.minimumf %10, %20 : vector<2x128xf32>
    %39 = arith.minimumf %14, %24 : vector<2x128xf32>
    %40 = arith.addf %38, %39 : vector<2x128xf32>
    %41 = arith.mulf %37, %40 : vector<2x128xf32>
    %42 = arith.addf %31, %34 : vector<2x128xf32>
    %43 = arith.subf %42, %41 : vector<2x128xf32>
    %cst = arith.constant 1.000000e+00 : f32
    %44 = vector.broadcast %cst : f32 to vector<2x128xf32>
    %45 = arith.addf %43, %44 : vector<2x128xf32>
    %46 = math.log %45 : vector<2x128xf32>
    %cst_44 = arith.constant 1.000000e+00 : f32
    %47 = vector.broadcast %cst_44 : f32 to vector<2x128xf32>
    %48 = arith.addf %41, %47 : vector<2x128xf32>
    %49 = math.log %48 : vector<2x128xf32>
    %50 = arith.subf %46, %49 : vector<2x128xf32>
    %51 = arith.subf %28, %18 : vector<2x128xf32>
    %52 = math.cos %51 : vector<2x128xf32>
    %cst_45 = arith.constant 1.000000e+00 : f32
    %53 = vector.broadcast %cst_45 : f32 to vector<2x128xf32>
    %54 = arith.subf %53, %52 : vector<2x128xf32>
    %cst_46 = arith.constant 2.000000e+01 : f32
    %55 = vector.broadcast %cst_46 : f32 to vector<2x128xf32>
    %56 = arith.mulf %55, %54 : vector<2x128xf32>
    %57 = arith.addf %50, %56 : vector<2x128xf32>
    %58 = arith.mulf %57, %6 : vector<2x128xf32>
    %cst_47 = arith.constant dense<0.000000e+00> : vector<128xf32>
    %59 = vector.multi_reduction <add>, %7, %cst_47 [0] : vector<2x128xf32> to vector<128xf32>
    %60 = vector.shape_cast %59 : vector<128xf32> to vector<1x128xf32>
    %cst_48 = arith.constant dense<0.000000e+00> : vector<128xf32>
    %61 = vector.multi_reduction <add>, %6, %cst_48 [0] : vector<2x128xf32> to vector<128xf32>
    %62 = vector.shape_cast %61 : vector<128xf32> to vector<1x128xf32>
    %cst_49 = arith.constant dense<0.000000e+00> : vector<128xf32>
    %63 = vector.multi_reduction <add>, %8, %cst_49 [0] : vector<2x128xf32> to vector<128xf32>
    %64 = vector.shape_cast %63 : vector<128xf32> to vector<1x128xf32>
    %cst_50 = arith.constant dense<0.000000e+00> : vector<128xf32>
    %65 = vector.multi_reduction <add>, %58, %cst_50 [0] : vector<2x128xf32> to vector<128xf32>
    %66 = vector.shape_cast %65 : vector<128xf32> to vector<1x128xf32>
    %67 = tpu.concatenate %60, %62, %64, %66 in 0 : vector<1x128xf32>, vector<1x128xf32>, vector<1x128xf32>, vector<1x128xf32> -> vector<4x128xf32>
    %c0_51 = arith.constant 0 : index
    %c0_52 = arith.constant 0 : index
    %c0_53 = arith.constant 0 : index
    %c0_54 = arith.constant 0 : index
    %68 = vector.load %arg7[%c0_51, %c0_52, %c0_53, %c0_54] : memref<1x1x4x128xf32, #tpu.memory_space<vmem>>, vector<1x1x4x128xf32>
    %69 = vector.shape_cast %68 : vector<1x1x4x128xf32> to vector<4x128xf32>
    %70 = vector.shape_cast %67 : vector<4x128xf32> to vector<1x1x4x128xf32>
    tpu.vector_store %arg7[%c0_51, %c0_52, %c0_53, %c0_54], %70 {strides = array<i32>} : memref<1x1x4x128xf32, #tpu.memory_space<vmem>>, vector<1x1x4x128xf32>,
    return
  }
  func.func @transform_0(%arg0: i32, %arg1: i32) -> (i32, i32, i32, i32) {
    %c0_i32 = arith.constant 0 : i32
    %c0_i32_0 = arith.constant 0 : i32
    %c0_i32_1 = arith.constant 0 : i32
    return %arg0, %c0_i32, %arg1, %c0_i32_0 : i32, i32, i32, i32
  }
  func.func @transform_1(%arg0: i32, %arg1: i32) -> (i32, i32, i32, i32) {
    %c0_i32 = arith.constant 0 : i32
    %c0_i32_0 = arith.constant 0 : i32
    %c0_i32_1 = arith.constant 0 : i32
    return %arg0, %c0_i32, %arg1, %c0_i32_0 : i32, i32, i32, i32
  }
  func.func @transform_2(%arg0: i32, %arg1: i32) -> (i32, i32, i32) {
    %c0_i32 = arith.constant 0 : i32
    %c0_i32_0 = arith.constant 0 : i32
    return %arg0, %arg1, %c0_i32 : i32, i32, i32
  }
  func.func @transform_3(%arg0: i32, %arg1: i32) -> (i32, i32, i32) {
    %c0_i32 = arith.constant 0 : i32
    %c0_i32_0 = arith.constant 0 : i32
    return %arg0, %arg1, %c0_i32 : i32, i32, i32
  }
  func.func @transform_4(%arg0: i32, %arg1: i32) -> (i32, i32, i32) {
    %c0_i32 = arith.constant 0 : i32
    %c0_i32_0 = arith.constant 0 : i32
    return %arg0, %arg1, %c0_i32 : i32, i32, i32
  }
  func.func @transform_5(%arg0: i32, %arg1: i32) -> (i32, i32, i32, i32) {
    %c0_i32 = arith.constant 0 : i32
    %c0_i32_0 = arith.constant 0 : i32
    %c0_i32_1 = arith.constant 0 : i32
    return %arg0, %arg1, %c0_i32, %c0_i32_0 : i32, i32, i32, i32
  }
}

</mosaic_0001>

<llo_original>
// kernel: tpu_custom_call.1
$region0: #{tpu_custom_call.1}
  #allocation0 [shape = 'u32[]', space=smem, size = 0x4, offset = 0x4, fixed_abs, tag = 'smem constant byte address 0x4 - core index']
  #allocation1 [shape = 'u32[144,128]{1,0:T(1,128)}', space=vmem, size = 0x12000, scoped, tag = 'internal scratch']
  %s0 = inlined_call_operand.hbm [shape: f32[2,5,2,128], index: 0, kind: input, shape index: {}]
  %s1 = inlined_call_operand.hbm [shape: f32[2,5,2,128], index: 1, kind: input, shape index: {}]
  %s2 = inlined_call_operand.hbm [shape: f32[2,2,128], index: 2, kind: input, shape index: {}]
  %s3 = inlined_call_operand.vmem [shape: f32[2,2,128], index: 3, kind: input, shape index: {}]
  %s4 = inlined_call_operand.hbm [shape: f32[2,2,128], index: 4, kind: input, shape index: {}]
  %s5 = inlined_call_operand.hbm [shape: f32[2,1,4,128], index: 5, kind: output, shape index: {}]
  %s6 = sld [smem:[#allocation0]]
  $region69: #{tpu_custom_call.1} parent=0
    _
  %s8 = ssub.s32 1, %s6
  %s9 = scalar_select 0, %s8, %s6
  $region1: #{tpu_custom_call.1} parent=0
    #allocation2 [shape = 'u8[10240]{0}', space=vmem, size = 0x2800, scoped, tag = 'input window, operand 0']
    #allocation3 [shape = 's32[2]{0}', space=sflag, size = 0x8, scoped, tag = 'scoped memory for tpu_custom_call.1']
    #allocation4 [shape = 's32[2]{0}', space=sflag, size = 0x8, scoped, tag = 'scoped memory for tpu_custom_call.1']
    #allocation5 [shape = 'u8[10240]{0}', space=vmem, size = 0x2800, scoped, tag = 'input window, operand 1']
    #allocation6 [shape = 's32[2]{0}', space=sflag, size = 0x8, scoped, tag = 'scoped memory for tpu_custom_call.1']
    #allocation7 [shape = 'u8[2048]{0}', space=vmem, size = 0x800, scoped, tag = 'input window, operand 2']
    #allocation8 [shape = 'u8[2048]{0}', space=vmem, size = 0x800, scoped, tag = 'input window, operand 4']
    #allocation9 [shape = 's32[2]{0}', space=sflag, size = 0x8, scoped, tag = 'scoped memory for tpu_custom_call.1']
    #allocation10 [shape = 'u8[4096]{0}', space=vmem, size = 0x1000, scoped, tag = 'output window, operand 0']
    %10 = vsyncpa [#allocation3], 0
    %s11 = scalar_lea.sflag [#allocation3], 1
    %12 = vsyncpa %s11, 0
    %13 = vsyncpa [#allocation6], 0
    %s14 = scalar_lea.sflag [#allocation6], 1
    %15 = vsyncpa %s14, 0
    %16 = vsyncpa [#allocation9], 0
    %s17 = scalar_lea.sflag [#allocation9], 1
    %18 = vsyncpa %s17, 0
    %19 = vsyncpa [#allocation4], 0
    %s20 = scalar_lea.sflag [#allocation4], 1
    %21 = vsyncpa %s20, 0
    loop: start=0, step=1, limit=4
    $region2: #{tpu_custom_call.1} parent=1 // loop_pre_header
      _
    $region3: #{tpu_custom_call.1} parent=1 // loop_header
      %s23 = sphi 0, %s27
      %p24 = scmp.ge.s32.totalorder %s23, 4
      %s30 = sphi 0, %s42
      %s31 = sphi 0, %s38
      %s32 = sphi 0, %s30
      %s33 = sphi 0, %s31
      %s34 = sphi 0, %s32
      %s35 = sphi 0, %s33
      %s47 = sphi 0, %s49
      %s50 = sphi 0, %s47
      %s51 = sphi 0, %s50
      %s67 = sphi 0, %s51
      %s75 = sphi 0, %s77
      %s78 = sphi 0, %s75
      %s79 = sphi 0, %s78
      %s95 = sphi 0, %s79
      %s103 = sphi 0, %s105
      %s106 = sphi 0, %s103
      %s107 = sphi 0, %s106
      %s123 = sphi 0, %s107
      %s131 = sphi 0, %s133
      %s134 = sphi 0, %s131
      %s135 = sphi 0, %s134
      %s151 = sphi 0, %s135
      %s159 = sphi 0, %s161
      %s162 = sphi 0, %s159
      %s163 = sphi 0, %s162
      %s179 = sphi 0, %s163
      %s187 = sphi 0, %s189
      %s190 = sphi 0, %s187
      %s191 = sphi 0, %s190
      %s207 = sphi 0, %s191
    $region4: #{tpu_custom_call.1} parent=1 // loop_header_branch
      %26 = sbr.rel (%p24) target = $region8
    $region5: #{tpu_custom_call.1} parent=1 // loop_body
      %s28 = ssub.s32 %s23, 1
      %s29 = ssub.s32 %s23, 2
      %s36 = sadd.s32 1, %s31
      %p37 = scmp.ge.s32.totalorder %s36, 1
      %s38 = scalar_select %p37, 0, %s36
      %s39 = sadd.s32 1, %s30
      %s40 = scalar_select %p37, %s39, %s30
      %p41 = scmp.ge.s32.totalorder %s40, 2
      %s42 = scalar_select %p41, 0, %s40
      %s43 = ssub.s32 %s30, %s42
      %s44 = ssub.s32 %s31, %s38
      %s45 = sor.u32 %s43, %s44
      %p46 = scmp.eq.s32.totalorder %s45, 0
      %s48 = sadd.s32 %s47, 1
      %s49 = scalar_select %p46, %s47, %s48
      %p52 = pneg %p46
      %p53 = scmp.eq.s32.totalorder %s23, 1
      %p54 = por %p52, %p53
      %p55 = scmp.ne.s32.totalorder %s47, %s50
      %p56 = scmp.eq.s32.totalorder %s23, 0
      %p57 = por %p55, %p56
      %p58 = scmp.ne.s32.totalorder %s47, %s50
      %p59 = scmp.eq.s32.totalorder %s28, 1
      %p60 = por %p58, %p59
      %p61 = scmp.ne.s32.totalorder %s50, %s51
      %p62 = scmp.eq.s32.totalorder %s28, 0
      %p63 = por %p61, %p62
      %p64 = scmp.ne.s32.totalorder %s50, %s51
      %p65 = scmp.eq.s32.totalorder %s29, 1
      %p66 = por %p64, %p65
      %p68 = scmp.ne.s32.totalorder %s51, %s67
      %p69 = scmp.eq.s32.totalorder %s29, 0
      %p70 = por %p68, %p69
      %s71 = ssub.s32 %s30, %s42
      %s72 = ssub.s32 %s31, %s38
      %s73 = sor.u32 %s71, %s72
      %p74 = scmp.eq.s32.totalorder %s73, 0
      %s76 = sadd.s32 %s75, 1
      %s77 = scalar_select %p74, %s75, %s76
      %p80 = pneg %p74
      %p81 = scmp.eq.s32.totalorder %s23, 1
      %p82 = por %p80, %p81
      %p83 = scmp.ne.s32.totalorder %s75, %s78
      %p84 = scmp.eq.s32.totalorder %s23, 0
      %p85 = por %p83, %p84
      %p86 = scmp.ne.s32.totalorder %s75, %s78
      %p87 = scmp.eq.s32.totalorder %s28, 1
      %p88 = por %p86, %p87
      %p89 = scmp.ne.s32.totalorder %s78, %s79
      %p90 = scmp.eq.s32.totalorder %s28, 0
      %p91 = por %p89, %p90
      %p92 = scmp.ne.s32.totalorder %s78, %s79
      %p93 = scmp.eq.s32.totalorder %s29, 1
      %p94 = por %p92, %p93
      %p96 = scmp.ne.s32.totalorder %s79, %s95
      %p97 = scmp.eq.s32.totalorder %s29, 0
      %p98 = por %p96, %p97
      %s99 = ssub.s32 %s30, %s42
      %s100 = ssub.s32 %s31, %s38
      %s101 = sor.u32 %s99, %s100
      %p102 = scmp.eq.s32.totalorder %s101, 0
      %s104 = sadd.s32 %s103, 1
      %s105 = scalar_select %p102, %s103, %s104
      %p108 = pneg %p102
      %p109 = scmp.eq.s32.totalorder %s23, 1
      %p110 = por %p108, %p109
      %p111 = scmp.ne.s32.totalorder %s103, %s106
      %p112 = scmp.eq.s32.totalorder %s23, 0
      %p113 = por %p111, %p112
      %p114 = scmp.ne.s32.totalorder %s103, %s106
      %p115 = scmp.eq.s32.totalorder %s28, 1
      %p116 = por %p114, %p115
      %p117 = scmp.ne.s32.totalorder %s106, %s107
      %p118 = scmp.eq.s32.totalorder %s28, 0
      %p119 = por %p117, %p118
      %p120 = scmp.ne.s32.totalorder %s106, %s107
      %p121 = scmp.eq.s32.totalorder %s29, 1
      %p122 = por %p120, %p121
      %p124 = scmp.ne.s32.totalorder %s107, %s123
      %p125 = scmp.eq.s32.totalorder %s29, 0
      %p126 = por %p124, %p125
      %s127 = ssub.s32 %s30, %s42
      %s128 = ssub.s32 %s31, %s38
      %s129 = sor.u32 %s127, %s128
      %p130 = scmp.eq.s32.totalorder %s129, 0
      %s132 = sadd.s32 %s131, 1
      %s133 = scalar_select %p130, %s131, %s132
      %p136 = pneg %p130
      %p137 = scmp.eq.s32.totalorder %s23, 1
      %p138 = por %p136, %p137
      %p139 = scmp.ne.s32.totalorder %s131, %s134
      %p140 = scmp.eq.s32.totalorder %s23, 0
      %p141 = por %p139, %p140
      %p142 = scmp.ne.s32.totalorder %s131, %s134
      %p143 = scmp.eq.s32.totalorder %s28, 1
      %p144 = por %p142, %p143
      %p145 = scmp.ne.s32.totalorder %s134, %s135
      %p146 = scmp.eq.s32.totalorder %s28, 0
      %p147 = por %p145, %p146
      %p148 = scmp.ne.s32.totalorder %s134, %s135
      %p149 = scmp.eq.s32.totalorder %s29, 1
      %p150 = por %p148, %p149
      %p152 = scmp.ne.s32.totalorder %s135, %s151
      %p153 = scmp.eq.s32.totalorder %s29, 0
      %p154 = por %p152, %p153
      %s155 = ssub.s32 %s30, %s42
      %s156 = ssub.s32 %s31, %s38
      %s157 = sor.u32 %s155, %s156
      %p158 = scmp.eq.s32.totalorder %s157, 0
      %s160 = sadd.s32 %s159, 1
      %s161 = scalar_select %p158, %s159, %s160
      %p164 = pneg %p158
      %p165 = scmp.eq.s32.totalorder %s23, 1
      %p166 = por %p164, %p165
      %p167 = scmp.ne.s32.totalorder %s159, %s162
      %p168 = scmp.eq.s32.totalorder %s23, 0
      %p169 = por %p167, %p168
      %p170 = scmp.ne.s32.totalorder %s159, %s162
      %p171 = scmp.eq.s32.totalorder %s28, 1
      %p172 = por %p170, %p171
      %p173 = scmp.ne.s32.totalorder %s162, %s163
      %p174 = scmp.eq.s32.totalorder %s28, 0
      %p175 = por %p173, %p174
      %p176 = scmp.ne.s32.totalorder %s162, %s163
      %p177 = scmp.eq.s32.totalorder %s29, 1
      %p178 = por %p176, %p177
      %p180 = scmp.ne.s32.totalorder %s163, %s179
      %p181 = scmp.eq.s32.totalorder %s29, 0
      %p182 = por %p180, %p181
      %s183 = ssub.s32 %s30, %s42
      %s184 = ssub.s32 %s31, %s38
      %s185 = sor.u32 %s183, %s184
      %p186 = scmp.eq.s32.totalorder %s185, 0
      %s188 = sadd.s32 %s187, 1
      %s189 = scalar_select %p186, %s187, %s188
      %p192 = pneg %p186
      %p193 = scmp.eq.s32.totalorder %s23, 1
      %p194 = por %p192, %p193
      %p195 = scmp.ne.s32.totalorder %s187, %s190
      %p196 = scmp.eq.s32.totalorder %s23, 0
      %p197 = por %p195, %p196
      %p198 = scmp.ne.s32.totalorder %s187, %s190
      %p199 = scmp.eq.s32.totalorder %s28, 1
      %p200 = por %p198, %p199
      %p201 = scmp.ne.s32.totalorder %s190, %s191
      %p202 = scmp.eq.s32.totalorder %s28, 0
      %p203 = por %p201, %p202
      %p204 = scmp.ne.s32.totalorder %s190, %s191
      %p205 = scmp.eq.s32.totalorder %s29, 1
      %p206 = por %p204, %p205
      %p208 = scmp.ne.s32.totalorder %s191, %s207
      %p209 = scmp.eq.s32.totalorder %s29, 0
      %p210 = por %p208, %p209
      %p211 = scmp.le.s32.totalorder 1, %s23
      %p212 = scmp.lt.s32.totalorder %s23, 3
      %p213 = pnand %p211, %p212
      %p214 = pneg %p213
      // Predicated region
      $region9: #{tpu_custom_call.1} parent=5 // pred_check
        _
      $region10: #{tpu_custom_call.1} parent=5 // pred_check_branch
        %216 = sbr.rel (%p213) target = $region12
      $region11: #{tpu_custom_call.1} parent=5 // pred_region
        %s217 = ssub.s32 %s23, 1
      $region12: #{tpu_custom_call.1} parent=5 // pred_fallthru
        _
      %p218 = scmp.lt.s32.totalorder %s23, 2
      // Predicated region
      $region13: #{tpu_custom_call.1} parent=5 // pred_check
        %p219 = pneg %p218
      $region14: #{tpu_custom_call.1} parent=5 // pred_check_branch
        %221 = sbr.rel (%p219) target = $region16
      $region15: #{tpu_custom_call.1} parent=5 // pred_region
        // Predicated region
        $region17: #{tpu_custom_call.1} parent=15 // pred_check
          %p222 = pneg %p57
        $region18: #{tpu_custom_call.1} parent=15 // pred_check_branch
          %224 = sbr.rel (%p222) target = $region20
        $region19: #{tpu_custom_call.1} parent=15 // pred_region
          %s225 = sand.u32 %s47, 1
          %s226 = scalar_lea.sflag [#allocation3], %s225
          %s227 = sand.u32 %s47, 1
          %s228 = smul.addr %s227, 10
          %s229 = scalar_lea.vmem [#allocation2], %s228
          %s231 = ssub.s32 160, 160
          %232 = vsyncadd %s226, %s231
          %s233 = smul.addr %s30, 5
          %s234 = sadd.s32 %s31, %s233
          %s235 = smul.addr %s234, 32
          %s236 = scalar_lea.hbm %s0, %s235
          %s237 = sshll.u32 %s229, 4
          %s238 = int_to_ptr.vmem [resolvable:$true] %s237
          %243 = dma.hbm_to_vmem [thread:$0]  %s236, 160, %s238, %s226, 32, 32, 2
        $region20: #{tpu_custom_call.1} parent=15 // pred_fallthru
          _
        // Predicated region
        $region21: #{tpu_custom_call.1} parent=15 // pred_check
          %p244 = pneg %p85
        $region22: #{tpu_custom_call.1} parent=15 // pred_check_branch
          %246 = sbr.rel (%p244) target = $region24
        $region23: #{tpu_custom_call.1} parent=15 // pred_region
          %s247 = sand.u32 %s23, 1
          %s248 = scalar_lea.sflag [#allocation6], %s247
          %s249 = sand.u32 %s75, 1
          %s250 = smul.addr %s249, 10
          %s251 = scalar_lea.vmem [#allocation5], %s250
          %s253 = ssub.s32 160, 160
          %254 = vsyncadd %s248, %s253
          %s255 = smul.addr %s30, 5
          %s256 = sadd.s32 %s31, %s255
          %s257 = smul.addr %s256, 32
          %s258 = scalar_lea.hbm %s1, %s257
          %s259 = sshll.u32 %s251, 4
          %s260 = int_to_ptr.vmem [resolvable:$true] %s259
          %265 = dma.hbm_to_vmem [thread:$0]  %s258, 160, %s260, %s248, 32, 32, 2
        $region24: #{tpu_custom_call.1} parent=15 // pred_fallthru
          _
        // Predicated region
        $region25: #{tpu_custom_call.1} parent=15 // pred_check
          %p266 = pneg %p113
        $region26: #{tpu_custom_call.1} parent=15 // pred_check_branch
          %268 = sbr.rel (%p266) target = $region28
        $region27: #{tpu_custom_call.1} parent=15 // pred_region
          %s269 = sand.u32 %s23, 1
          %s270 = scalar_lea.sflag [#allocation6], %s269
          %s271 = sand.u32 %s103, 1
          %s272 = smul.addr %s271, 2
          %s273 = scalar_lea.vmem [#allocation7], %s272
          %s275 = ssub.s32 32, 32
          %276 = vsyncadd %s270, %s275
          %s277 = sadd.s32 %s31, %s30
          %s278 = smul.addr %s277, 32
          %s279 = scalar_lea.hbm %s2, %s278
          %s281 = sshll.u32 %s273, 4
          %s282 = int_to_ptr.vmem [resolvable:$true] %s281
          %284 = dma.hbm_to_vmem [thread:$0]  %s279, 32, %s282, %s270
        $region28: #{tpu_custom_call.1} parent=15 // pred_fallthru
          _
        // Predicated region
        $region29: #{tpu_custom_call.1} parent=15 // pred_check
          %p285 = pneg %p141
        $region30: #{tpu_custom_call.1} parent=15 // pred_check_branch
          %287 = sbr.rel (%p285) target = $region32
        $region31: #{tpu_custom_call.1} parent=15 // pred_region
          %p288 = scmp.lt.s32.totalorder %s30, 1
          %s289 = scalar_select %p288, %s30, 1
          %p290 = scmp.lt.s32.totalorder %s31, 0
          %s291 = scalar_select %p290, %s31, 0
          %s292 = sadd.s32 %s291, %s289
          %s293 = smul.addr %s292, 2
          %s294 = scalar_lea.vmem %s3, %s293
        $region32: #{tpu_custom_call.1} parent=15 // pred_fallthru
          _
        // Predicated region
        $region33: #{tpu_custom_call.1} parent=15 // pred_check
          %p295 = pneg %p169
        $region34: #{tpu_custom_call.1} parent=15 // pred_check_branch
          %297 = sbr.rel (%p295) target = $region36
        $region35: #{tpu_custom_call.1} parent=15 // pred_region
          %s298 = sand.u32 %s159, 1
          %s299 = scalar_lea.sflag [#allocation9], %s298
          %s300 = sand.u32 %s159, 1
          %s301 = smul.addr %s300, 2
          %s302 = scalar_lea.vmem [#allocation8], %s301
          %s304 = ssub.s32 32, 32
          %305 = vsyncadd %s299, %s304
          %s306 = sadd.s32 %s31, %s30
          %s307 = smul.addr %s306, 32
          %s308 = scalar_lea.hbm %s4, %s307
          %s310 = sshll.u32 %s302, 4
          %s311 = int_to_ptr.vmem [resolvable:$true] %s310
          %313 = dma.hbm_to_vmem [thread:$0]  %s308, 32, %s311, %s299
        $region36: #{tpu_custom_call.1} parent=15 // pred_fallthru
          _
      $region16: #{tpu_custom_call.1} parent=5 // pred_fallthru
        _
      %p314 = scmp.le.s32.totalorder 1, %s23
      %p315 = scmp.lt.s32.totalorder %s23, 3
      %p316 = pnand %p314, %p315
      %p317 = pneg %p316
      // Predicated region
      $region37: #{tpu_custom_call.1} parent=5 // pred_check
        _
      $region38: #{tpu_custom_call.1} parent=5 // pred_check_branch
        %319 = sbr.rel (%p316) target = $region40
      $region39: #{tpu_custom_call.1} parent=5 // pred_region
        %s320 = ssub.s32 %s23, 1
        %s321 = sand.u32 %s50, 1
        %s322 = scalar_lea.sflag [#allocation3], %s321
        %s323 = sand.u32 %s50, 1
        %s324 = smul.addr %s323, 10
        %s325 = scalar_lea.vmem [#allocation2], %s324
        // Predicated region
        $region41: #{tpu_custom_call.1} parent=39 // pred_check
          %p326 = pneg %p63
        $region42: #{tpu_custom_call.1} parent=39 // pred_check_branch
          %328 = sbr.rel (%p326) target = $region44
        $region43: #{tpu_custom_call.1} parent=39 // pred_region
          %329 = dma.done %s322, 160
        $region44: #{tpu_custom_call.1} parent=39 // pred_fallthru
          _
        %s330 = sand.u32 %s28, 1
        %s331 = scalar_lea.sflag [#allocation6], %s330
        %s332 = sand.u32 %s78, 1
        %s333 = smul.addr %s332, 10
        %s334 = scalar_lea.vmem [#allocation5], %s333
        // Predicated region
        $region45: #{tpu_custom_call.1} parent=39 // pred_check
          %p335 = pneg %p91
        $region46: #{tpu_custom_call.1} parent=39 // pred_check_branch
          %337 = sbr.rel (%p335) target = $region48
        $region47: #{tpu_custom_call.1} parent=39 // pred_region
          %338 = dma.done %s331, 160
        $region48: #{tpu_custom_call.1} parent=39 // pred_fallthru
          _
        %s339 = sand.u32 %s28, 1
        %s340 = scalar_lea.sflag [#allocation6], %s339
        %s341 = sand.u32 %s106, 1
        %s342 = smul.addr %s341, 2
        %s343 = scalar_lea.vmem [#allocation7], %s342
        // Predicated region
        $region49: #{tpu_custom_call.1} parent=39 // pred_check
          %p344 = pneg %p119
        $region50: #{tpu_custom_call.1} parent=39 // pred_check_branch
          %346 = sbr.rel (%p344) target = $region52
        $region51: #{tpu_custom_call.1} parent=39 // pred_region
          %347 = dma.done %s340, 32
        $region52: #{tpu_custom_call.1} parent=39 // pred_fallthru
          _
        %s348 = sand.u32 %s162, 1
        %s349 = scalar_lea.sflag [#allocation9], %s348
        %s350 = sand.u32 %s162, 1
        %s351 = smul.addr %s350, 2
        %s352 = scalar_lea.vmem [#allocation8], %s351
        // Predicated region
        $region53: #{tpu_custom_call.1} parent=39 // pred_check
          %p353 = pneg %p175
        $region54: #{tpu_custom_call.1} parent=39 // pred_check_branch
          %355 = sbr.rel (%p353) target = $region56
        $region55: #{tpu_custom_call.1} parent=39 // pred_region
          %356 = dma.done %s349, 32
        $region56: #{tpu_custom_call.1} parent=39 // pred_fallthru
          _
        %s357 = sand.u32 %s50, 1
        %s358 = scalar_lea.sflag [#allocation3], %s357
        %s359 = sand.u32 %s50, 1
        %s360 = smul.addr %s359, 10
        %s361 = scalar_lea.vmem [#allocation2], %s360
        %p362 = pneg %p63
        %p363 = pneg %p60
        %s364 = sand.u32 %s28, 1
        %s365 = scalar_lea.sflag [#allocation6], %s364
        %s366 = sand.u32 %s78, 1
        %s367 = smul.addr %s366, 10
        %s368 = scalar_lea.vmem [#allocation5], %s367
        %p369 = pneg %p91
        %p370 = pneg %p88
        %s371 = sand.u32 %s28, 1
        %s372 = scalar_lea.sflag [#allocation6], %s371
        %s373 = sand.u32 %s106, 1
        %s374 = smul.addr %s373, 2
        %s375 = scalar_lea.vmem [#allocation7], %s374
        %p376 = pneg %p119
        %p377 = pneg %p116
        %p378 = scmp.lt.s32.totalorder %s32, 1
        %s379 = scalar_select %p378, %s32, 1
        %p380 = scmp.lt.s32.totalorder %s33, 0
        %s381 = scalar_select %p380, %s33, 0
        %s382 = sadd.s32 %s381, %s379
        %s383 = smul.addr %s382, 2
        %s384 = scalar_lea.vmem %s3, %s383
        %p385 = pneg %p147
        %p386 = pneg %p144
        %s387 = sand.u32 %s162, 1
        %s388 = scalar_lea.sflag [#allocation9], %s387
        %s389 = sand.u32 %s162, 1
        %s390 = smul.addr %s389, 2
        %s391 = scalar_lea.vmem [#allocation8], %s390
        %p392 = pneg %p175
        %p393 = pneg %p172
        %p394 = pneg %p203
        %p395 = pneg %p200
        %s396 = sand.u32 %s190, 1
        %s397 = scalar_lea.sflag [#allocation4], %s396
        %s398 = sand.u32 %s190, 1
        %s399 = smul.addr %s398, 4
        %s400 = scalar_lea.vmem [#allocation10], %s399
        %p401 = scmp.lt.s32.totalorder %s32, 1
        %s402 = scalar_select %p401, %s32, 1
        %p403 = scmp.lt.s32.totalorder %s33, 0
        %s404 = scalar_select %p403, %s33, 0
        %s405 = sadd.s32 %s404, %s402
        %s406 = smul.addr %s405, 2
        %s407 = scalar_lea.vmem %s3, %s406
        %v408 = vld [vmem:[%s343] sm:$0x3]
        %v409 = vld [vmem:[%s407] sm:$0x3]
        %v410 = vld [vmem:[%s352] sm:$0x3]
        %v411 = vmul.f32 %v408, %v410
        %v412 = vmul.f32 %v411, %v409
        %v413 = vmul.f32 %v409, %v410
        %v414 = vld [vmem:[%s325] sm:$0x3]
        %s415 = scalar_lea.vmem %s325, 2 [#allocation2]
        %v416 = vld [vmem:[%s415] sm:$0x3]
        %s417 = scalar_lea.vmem %s325, 4 [#allocation2]
        %v418 = vld [vmem:[%s417] sm:$0x3]
        %s419 = scalar_lea.vmem %s325, 6 [#allocation2]
        %v420 = vld [vmem:[%s419] sm:$0x3]
        %s421 = scalar_lea.vmem %s325, 8 [#allocation2]
        %v422 = vld [vmem:[%s421] sm:$0x3]
        %v423 = vld [vmem:[%s334] sm:$0x3]
        %s424 = scalar_lea.vmem %s334, 2 [#allocation5]
        %v425 = vld [vmem:[%s424] sm:$0x3]
        %s426 = scalar_lea.vmem %s334, 4 [#allocation5]
        %v427 = vld [vmem:[%s426] sm:$0x3]
        %s428 = scalar_lea.vmem %s334, 6 [#allocation5]
        %v429 = vld [vmem:[%s428] sm:$0x3]
        %s430 = scalar_lea.vmem %s334, 8 [#allocation5]
        %v431 = vld [vmem:[%s430] sm:$0x3]
        %v432 = vadd.f32 %v414, %v418
        %v433 = vadd.f32 %v416, %v420
        %v434 = vmul.f32 %v432, %v433
        %v435 = vadd.f32 %v423, %v427
        %v436 = vadd.f32 %v425, %v429
        %v437 = vmul.f32 %v435, %v436
        %v438 = vmin.f32 %v416, %v425
        %v439 = vmin.f32 %v420, %v429
        %v440 = vadd.f32 %v438, %v439
        %v441 = vmin.f32 %v414, %v423
        %v442 = vmin.f32 %v418, %v427
        %v443 = vadd.f32 %v441, %v442
        %v444 = vmul.f32 %v440, %v443
        %v445 = vadd.f32 %v434, %v437
        %v446 = vsub.f32 %v445, %v444
        %v447 = vadd.f32 %v446, 1.0
        %v448 = vlog2.pop %v447
        %v449 = vmul.f32 %v448, 0.6931472
        %v450 = vadd.f32 %v444, 1.0
        %v451 = vlog2.pop %v450
        %v452 = vmul.f32 %v451, 0.6931472
        %v453 = vsub.f32 %v449, %v452
        %v454 = vsub.f32 %v431, %v422
        %v455 = vand.u32 2147483647, %v454
        %vm456 = vcmp.le.f32.partialorder %v455, 0.7853982
        %vm457 = vcmp.lt.s32.totalorder %v454, 0
        %v458 = vand.u32 %v454, 2139095040
        %v459 = vshrl.u32 %v458, 23
        %v460 = vsub.s32 %v459, 127
        %v461 = vand.u32 2147483647, %v454
        %v462 = vand.u32 %v461, 8388607
        %v463 = vor.u32 %v462, 8388608
        %v464 = vsub.s32 0, %v463
        %v465 = vadd.s32 %v460, 1
        %vm466 = vcmp.gt.s32.totalorder %v465, 0
        %v467 = vsel %vm466, %v465, 0
        %v468 = vshrl.u32 %v467, 5
        %v469 = vand.u32 %v467, 31
        %v470 = vsub.s32 32, %v469
        %v471 = vshrl.u32 683565275, %v470
        %v472 = vshll.u32 683565275, %v469
        %v473 = vshrl.u32 2475754826, %v470
        %v474 = vor.u32 %v472, %v473
        %v475 = vshll.u32 2475754826, %v469
        %v476 = vshrl.u32 2131351028, %v470
        %v477 = vor.u32 %v475, %v476
        %v478 = vshll.u32 2131351028, %v469
        %v479 = vshrl.u32 2102212464, %v470
        %v480 = vor.u32 %v478, %v479
        %v481 = vshll.u32 2102212464, %v469
        %v482 = vshrl.u32 920167782, %v470
        %v483 = vor.u32 %v481, %v482
        %v484 = vshll.u32 920167782, %v469
        %v485 = vshrl.u32 1326507024, %v470
        %v486 = vor.u32 %v484, %v485
        %vm487 = vcmp.lt.s32.totalorder %v468, 1
        %vm488 = vcmp.lt.s32.totalorder %v468, 2
        %vm489 = vcmp.lt.s32.totalorder %v468, 3
        %vm490 = vcmp.lt.s32.totalorder %v468, 4
        %v491 = vsel %vm487, %v471, %v474
        %v492 = vsel %vm490, %v480, 2102212464
        %v493 = vsel %vm489, %v477, %v492
        %v494 = vsel %vm488, %v491, %v493
        %v495 = vsel %vm487, %v474, %v477
        %v496 = vsel %vm490, %v483, 920167782
        %v497 = vsel %vm489, %v480, %v496
        %v498 = vsel %vm488, %v495, %v497
        %v499 = vsel %vm487, %v477, %v480
        %v500 = vsel %vm490, %v486, 1326507024
        %v501 = vsel %vm489, %v483, %v500
        %v502 = vsel %vm488, %v499, %v501
        %v503 = vshll.u32 %v463, 8
        %v504 = vmul.u32.u64.compose %v503, %v502
        %v505 = vextract.low.u32 %v504
        %v506 = vextract.high.u32 %v504
        %v507 = vmul.u32.u64.compose %v503, %v498
        %v508 = vextract.low.u32 %v507
        %v509 = vextract.high.u32 %v507
        %v510 = vmul.u32 %v503, %v494
        %v511 = vadd.s32 %v506, %v508
        %vm512 = vc.u32 %v506, %v508
        %v513 = vadd.s32 %v509, 1
        %v514 = vsel %vm512, %v513, %v509
        %v515 = vadd.s32 %v510, %v514
        %v516 = vadd.s32 %v515, 536870912
        %v517 = vshrl.u32 %v516, 30
        %v518 = vshll.u32 %v517, 30
        %v519 = vsub.s32 %v515, %v518
        %vm520 = vcmp.lt.s32.totalorder %v519, 0
        %v521 = vsub.s32 0, %v519
        %v522 = vsel %vm520, %v521, %v519
        %v523 = vclz %v522
        %v524 = vsub.s32 %v523, 2
        %vm525 = vcmp.gt.s32.totalorder 0, %v524
        %v526 = vsel %vm525, 0, %v524
        %v527 = vsub.s32 32, %v526
        %v528 = vshll.u32 %v519, %v526
        %v529 = vshrl.u32 %v511, %v527
        %v530 = vor.u32 %v528, %v529
        %v531 = vsub.s32 4294967266, %v526
        %v532 = vadd.s32 %v531, 127
        %v533 = vshll.u32 %v532, 23
        %v534 = vor.u32 4788187, %v533
        %v535 = vand.u32 2147483647, %v534
        %v537 = vcvt.s32.f32 %v530
        %v538 = vmul.f32 %v537, %v535
        %v539 = vxor.u32 %v538, 2147483648
        %v540 = vsel %vm457, %v539, %v538
        %v541 = vsub.s32 4, %v517
        %v542 = vsel %vm457, %v541, %v517
        %v543 = vsel %vm456, %v454, %v540
        %v544 = vsel %vm456, 0, %v542
        %v545 = vcosq.f32.pop %v543
        %v546 = vsinq.f32.pop %v543
        %vm547 = vweird.f32 %v454
        %v548 = vand.u32 %v544, 3
        %vm549 = vcmp.lt.s32.totalorder %v548, 2
        %vm550 = vcmp.eq.s32.totalorder %v548, 0
        %v551 = vxor.u32 %v546, 2147483648
        %v552 = vsel %vm550, %v545, %v551
        %vm553 = vcmp.eq.s32.totalorder %v548, 2
        %v554 = vxor.u32 %v545, 2147483648
        %v555 = vsel %vm553, %v554, %v546
        %v556 = vsel %vm549, %v552, %v555
        %v557 = vsel %vm547, nan, %v556
        %v558 = vsub.f32 1.0, %v557
        %v559 = vmul.f32 %v558, 20.0
        %v560 = vadd.f32 %v453, %v559
        %v561 = vmul.f32 %v560, %v411
        %vm562 = vcmask 1041408
        %v563 = vsel %vm562, %v412, 0.0
        %v564 = vrot.slane %v563, 4
        %v565 = vadd.f32 %v563, %v564
        %v566 = vrot.slane %v565, 2
        %v567 = vadd.f32 %v565, %v566
        %v568 = vrot.slane %v567, 1
        %v569 = vadd.f32 %v567, %v568
        %v570 = vsel %vm562, %v411, 0.0
        %v571 = vrot.slane %v570, 4
        %v572 = vadd.f32 %v570, %v571
        %v573 = vrot.slane %v572, 2
        %v574 = vadd.f32 %v572, %v573
        %v575 = vrot.slane %v574, 1
        %v576 = vadd.f32 %v574, %v575
        %v577 = vsel %vm562, %v413, 0.0
        %v578 = vrot.slane %v577, 4
        %v579 = vadd.f32 %v577, %v578
        %v580 = vrot.slane %v579, 2
        %v581 = vadd.f32 %v579, %v580
        %v582 = vrot.slane %v581, 1
        %v583 = vadd.f32 %v581, %v582
        %v584 = vsel %vm562, %v561, 0.0
        %v585 = vrot.slane %v584, 4
        %v586 = vadd.f32 %v584, %v585
        %v587 = vrot.slane %v586, 2
        %v588 = vadd.f32 %v586, %v587
        %v589 = vrot.slane %v588, 1
        %v590 = vadd.f32 %v588, %v589
        %vm591 = vcmask 1040384
        %v592 = vsel %vm591, %v569, %v576
        %v593 = vsel %vm562, %v592, %v583
        %vm594 = vcmask 1042432
        %v595 = vsel %vm594, %v593, %v590
        %596 = vst [vmem:[%s400] sm:$0xf] %v595
        %s597 = sand.u32 %s190, 1
        %s598 = scalar_lea.sflag [#allocation4], %s597
        %s599 = sand.u32 %s190, 1
        %s600 = smul.addr %s599, 4
        %s601 = scalar_lea.vmem [#allocation10], %s600
        // Predicated region
        $region57: #{tpu_custom_call.1} parent=39 // pred_check
          %p602 = pneg %p200
        $region58: #{tpu_custom_call.1} parent=39 // pred_check_branch
          %604 = sbr.rel (%p602) target = $region60
        $region59: #{tpu_custom_call.1} parent=39 // pred_region
          %s606 = ssub.s32 64, 64
          %607 = vsyncadd %s598, %s606
          %s608 = sadd.s32 %s33, %s32
          %s609 = smul.addr %s608, 64
          %s610 = scalar_lea.hbm %s5, %s609
          %s612 = sshll.u32 %s601, 4
          %s613 = int_to_ptr.vmem [resolvable:$true] %s612
          %615 = dma.vmem_to_hbm [thread:$0]  %s613, 64, %s610, %s598
        $region60: #{tpu_custom_call.1} parent=39 // pred_fallthru
          _
      $region40: #{tpu_custom_call.1} parent=5 // pred_fallthru
        _
      %p616 = scmp.le.s32.totalorder 2, %s23
      // Predicated region
      $region61: #{tpu_custom_call.1} parent=5 // pred_check
        %p617 = pneg %p616
      $region62: #{tpu_custom_call.1} parent=5 // pred_check_branch
        %619 = sbr.rel (%p617) target = $region64
      $region63: #{tpu_custom_call.1} parent=5 // pred_region
        %s620 = ssub.s32 %s23, 2
        // Predicated region
        $region65: #{tpu_custom_call.1} parent=63 // pred_check
          %p621 = pneg %p206
        $region66: #{tpu_custom_call.1} parent=63 // pred_check_branch
          %623 = sbr.rel (%p621) target = $region68
        $region67: #{tpu_custom_call.1} parent=63 // pred_region
          %s624 = sand.u32 %s191, 1
          %s625 = scalar_lea.sflag [#allocation4], %s624
          %s626 = sand.u32 %s191, 1
          %s627 = smul.addr %s626, 4
          %s628 = scalar_lea.vmem [#allocation10], %s627
          %629 = dma.done %s625, 64
        $region68: #{tpu_custom_call.1} parent=63 // pred_fallthru
          _
      $region64: #{tpu_custom_call.1} parent=5 // pred_fallthru
        _
    $region6: #{tpu_custom_call.1} parent=1 // loop_footer
      %s27 = sadd.s32 1, %s23
    $region7: #{tpu_custom_call.1} parent=1 // loop_footer_branch
      %22 = sbr.rel target = $region3
    $region8: #{tpu_custom_call.1} parent=1 // loop_exit
      _
    %630 = vsyncpa [#allocation3], 1
    %s631 = scalar_lea.sflag [#allocation3], 1
    %632 = vsyncpa %s631, 1
    %633 = vsyncpa [#allocation6], 1
    %s634 = scalar_lea.sflag [#allocation6], 1
    %635 = vsyncpa %s634, 1
    %636 = vsyncpa [#allocation9], 1
    %s637 = scalar_lea.sflag [#allocation9], 1
    %638 = vsyncpa %s637, 1
    %639 = vsyncpa [#allocation4], 1
    %s640 = scalar_lea.sflag [#allocation4], 1
    %641 = vsyncpa %s640, 1

</llo_original>
